<compile_context>
chip_gen: v7x
topology: tpu7x:2x2x1
jax: 0.10.0
libtpu: 0.0.40
codegen_flags: <defaults>
</compile_context>

<pallas_src>
import functools

import jax
import jax.numpy as jnp
from jax.experimental import pallas as pl
from jax.experimental.pallas import tpu as pltpu


VMEM_LIMIT = 32 * 1024 * 1024   # portable scoped-VMEM budget (v7x: 64 MiB physical)
TM_MAX = 4096                   # stage-1 M tile: ~0.5 MiB per buffer at K=32 bf16


def _round_up(x, m):
    return ((x + m - 1) // m) * m


def _choose_tm(m, tm_max=TM_MAX):
    """Largest row tile <= tm_max (multiple of 8), preferring >= 2 grid steps
    so both v7x TensorCores are used on the 'parallel' axis."""
    if m <= 8:
        return m
    half = _round_up(pl.cdiv(m, 2), 8)
    return min(tm_max, half, _round_up(m, 8))


# ---------------------------------------------------------------------------
# Stage 1: im2col-matmul + folded BN + ReLU (M-tiled, unpadded output)
# ---------------------------------------------------------------------------
def _conv_mm_shift_relu_kernel(x_ref, w_ref, shift_ref, o_ref):
    """One M-tile of (im2col @ W_folded) + BN shift, then ReLU."""
    y = jnp.dot(x_ref[...], w_ref[...], preferred_element_type=jnp.float32)
    o_ref[...] = jnp.maximum(y + shift_ref[...], 0.0).astype(o_ref.dtype)


def conv_relu(patches, w_mat, shift, *, out_dtype=jnp.bfloat16, tm_max=TM_MAX):
    """patches (M, K) @ w_mat (K, C) + shift (1, C), ReLU.  Large M-tiled grid.

    Output keeps the true channel count C (no lane padding): in this memory-bound
    regime 4x fewer writeback bytes beats lane-dense stores.
    """
    M, K = patches.shape
    C = w_mat.shape[1]
    TM = _choose_tm(M, tm_max)
    grid_m = pl.cdiv(M, TM)
    return pl.pallas_call(
        _conv_mm_shift_relu_kernel,
        out_shape=jax.ShapeDtypeStruct((M, C), out_dtype),
        grid_spec=pltpu.PrefetchScalarGridSpec(
            num_scalar_prefetch=0,
            grid=(grid_m,),
            in_specs=[
                pl.BlockSpec((TM, K), lambda i: (i, 0)),   # streamed patch tiles
                pl.BlockSpec((K, C), lambda i: (0, 0)),    # resident folded weights
                pl.BlockSpec((1, C), lambda i: (0, 0)),    # resident BN shift (f32)
            ],
            out_specs=pl.BlockSpec((TM, C), lambda i: (i, 0)),
        ),
        compiler_params=pltpu.CompilerParams(
            dimension_semantics=("parallel",),
            vmem_limit_bytes=VMEM_LIMIT),
    )(patches, w_mat, shift)


# ---------------------------------------------------------------------------
# Stage 2: fused 3x3/s2 conv (9 phase taps) + folded BN + ReLU + global-avg-pool
# ---------------------------------------------------------------------------
def _stage2_kernel(y_ref, w_ref, shift_ref, mask_ref, o_ref, *, ow2, inv_l):
    """One image: 3x3/s2 conv on the phase-split activation + BN + ReLU + GAP.

    y_ref    : (1, 4, L2, C1) bf16  stage-1 activation, phase p,q = parity of pixel
    w_ref    : (9, C1, C2)    bf16  per-tap weights, BN scale folded in (t = 3*di + dj)
    shift_ref: (1, C2)        f32   BN shift
    mask_ref : (2, L2, 1)     f32   [0] = (r != 0), [1] = (c != 0) over flat r*ow2+c
    o_ref    : (1, 1, C2)     f32   pooled feature
    """
    L2 = y_ref.shape[2]
    C2 = w_ref.shape[2]
    m_r = mask_ref[0]           # zero where the row-shifted tap reads the top padding
    m_c = mask_ref[1]           # zero where the col-shifted tap reads the left padding
    m_rc = m_r * m_c

    acc = jnp.zeros((L2, C2), jnp.float32)
    for di in range(3):
        for dj in range(3):
            p = 0 if di == 1 else 1            # input row 2r+di-1 -> phase row parity
            q = 0 if dj == 1 else 1
            sr = 1 if di == 0 else 0           # needs phase row r-1 (zero at r == 0)
            sc = 1 if dj == 0 else 0           # needs phase col c-1 (zero at c == 0)
            t = y_ref[0, 2 * p + q].astype(jnp.float32)          # (L2, C1)
            shift_amt = sr * ow2 + sc
            if shift_amt:
                mask = m_rc if (sr and sc) else (m_r if sr else m_c)
                t = pltpu.roll(t, shift_amt, axis=0) * mask
            acc = acc + jnp.dot(t.astype(jnp.bfloat16), w_ref[3 * di + dj],
                                preferred_element_type=jnp.float32)

    y2 = jnp.maximum(acc + shift_ref[...], 0.0)
    pooled = jnp.sum(y2, axis=0, keepdims=True) * inv_l
    o_ref[...] = pooled.reshape(1, 1, C2)


def conv3x3s2_relu_gap(y1_phases, w_taps, shift, masks, *, ow2):
    """y1_phases (N, 4, L2, C1) -> pooled features (N, 1, C2).  Grid over images."""
    N, _, L2, C1 = y1_phases.shape
    C2 = w_taps.shape[2]
    kernel = functools.partial(_stage2_kernel, ow2=ow2, inv_l=1.0 / L2)
    return pl.pallas_call(
        kernel,
        out_shape=jax.ShapeDtypeStruct((N, 1, C2), jnp.float32),
        grid_spec=pltpu.PrefetchScalarGridSpec(
            num_scalar_prefetch=0,
            grid=(N,),
            in_specs=[
                pl.BlockSpec((1, 4, L2, C1), lambda n: (n, 0, 0, 0)),  # streamed image
                pl.BlockSpec((9, C1, C2), lambda n: (0, 0, 0)),        # resident weights
                pl.BlockSpec((1, C2), lambda n: (0, 0)),               # resident BN shift
                pl.BlockSpec((2, L2, 1), lambda n: (0, 0, 0)),         # resident masks
            ],
            out_specs=pl.BlockSpec((1, 1, C2), lambda n: (n, 0, 0)),
        ),
        compiler_params=pltpu.CompilerParams(
            dimension_semantics=("parallel",),
            vmem_limit_bytes=VMEM_LIMIT),
    )(y1_phases, w_taps, shift, masks)


# ---------------------------------------------------------------------------
# JAX glue: phase-ordered im2col, BN folding, weight prep
# ---------------------------------------------------------------------------
def im2col_phase_split(x_nhwc, k, stride, pad):
    """k x k / stride-2 im2col with rows ordered (n, p, q, r, c), output pixel (2r+p, 2c+q).

    The stage-1 kernel's output then lands in HBM already phase-split for stage 2,
    so no second patch matrix is ever materialised.
    """
    N, H, W, C = x_nhwc.shape
    xp = jnp.pad(x_nhwc, ((0, 0), (pad, pad), (pad, pad), (0, 0)))
    OH = (H + 2 * pad - k) // stride + 1
    OW = (W + 2 * pad - k) // stride + 1
    assert OH % 2 == 0 and OW % 2 == 0, "input H and W must be multiples of 4"
    cols = []
    for i in range(k):
        for j in range(k):
            cols.append(xp[:, i:i + stride * OH:stride, j:j + stride * OW:stride, :])
    col = jnp.stack(cols, axis=3).reshape(N, OH, OW, k * k * C)     # (kh, kw, cin) order
    oh2, ow2 = OH // 2, OW // 2
    col = col.reshape(N, oh2, 2, ow2, 2, k * k * C)                 # (n, r, p, c, q, K)
    col = jnp.transpose(col, (0, 2, 4, 1, 3, 5))                    # (n, p, q, r, c, K)
    return col.reshape(N * 4 * oh2 * ow2, k * k * C), OH, OW, oh2, ow2


def fold_bn(gamma, beta, mean, var, eps=1e-5):
    scale = gamma / jnp.sqrt(var + eps)
    shift = beta - mean * scale
    return scale.reshape(1, -1), shift.reshape(1, -1)


def prep_conv_params(w_oihw, gamma, beta, mean, var, k_pad):
    """PyTorch (Cout, Cin, KH, KW) conv + eval BN -> (k_pad, Cout) bf16 W, (1, Cout) f32 shift."""
    cout = w_oihw.shape[0]
    w_mat = jnp.transpose(w_oihw, (2, 3, 1, 0)).reshape(-1, cout)   # (K, Cout)
    scale, shift = fold_bn(gamma, beta, mean, var)
    w_fold = w_mat * scale                                          # fold BN scale into W
    kk = w_fold.shape[0]
    w_pad = jnp.zeros((k_pad, cout), jnp.float32).at[:kk, :].set(w_fold)
    return w_pad.astype(jnp.bfloat16), shift                        # shift stays f32


def prep_conv_taps(w_oihw, gamma, beta, mean, var):
    """(Cout, Cin, 3, 3) conv + eval BN -> (9, Cin, Cout) bf16 tap weights + (1, Cout) shift."""
    scale, shift = fold_bn(gamma, beta, mean, var)
    w = jnp.transpose(w_oihw, (2, 3, 1, 0))                         # (kh, kw, Cin, Cout)
    w = w.reshape(9, w.shape[2], w.shape[3]) * scale.reshape(1, 1, -1)
    return w.astype(jnp.bfloat16), shift


def init_params(key, cin=3, c1=32, c2=64, k=3):
    ks = jax.random.split(key, 10)
    p = {}
    # conv weights in PyTorch layout (Cout, Cin, KH, KW), bias=False (timm-style)
    p["w1"] = jax.random.normal(ks[0], (c1, cin, k, k), jnp.float32) * 0.1
    p["w2"] = jax.random.normal(ks[1], (c2, c1, k, k), jnp.float32) * 0.05
    # BatchNorm (eval-mode running stats), deterministic non-trivial values
    p["g1"] = 1.0 + 0.1 * jax.random.normal(ks[2], (c1,), jnp.float32)
    p["b1"] = 0.1 * jax.random.normal(ks[3], (c1,), jnp.float32)
    p["m1"] = 0.1 * jax.random.normal(ks[4], (c1,), jnp.float32)
    p["v1"] = 1.0 + 0.1 * jax.random.uniform(ks[5], (c1,), jnp.float32)
    p["g2"] = 1.0 + 0.1 * jax.random.normal(ks[6], (c2,), jnp.float32)
    p["b2"] = 0.1 * jax.random.normal(ks[7], (c2,), jnp.float32)
    p["m2"] = 0.1 * jax.random.normal(ks[8], (c2,), jnp.float32)
    p["v2"] = 1.0 + 0.1 * jax.random.uniform(ks[9], (c2,), jnp.float32)
    return p


# ---------------------------------------------------------------------------
# Forward pass
# ---------------------------------------------------------------------------
def image_encoder_forward(params, x_nchw):
    """Forward pass of the synthetic ImageEncoder.  Input NCHW, output (N, C2)."""
    x = jnp.transpose(x_nchw, (0, 2, 3, 1)).astype(jnp.float32)     # NCHW -> NHWC
    N = x.shape[0]
    k, stride, pad = 3, 2, 1
    C1 = params["w1"].shape[0]
    C2 = params["w2"].shape[0]

    # --- stage 1: conv3x3/s2 + folded BN + ReLU ------------------------------
    patches1, _, _, oh2, ow2 = im2col_phase_split(x, k, stride, pad)  # (N*4*L2, 27)
    K1 = patches1.shape[1]
    K1p = 8 * pl.cdiv(K1, 8)                                         # 27 -> 32
    w1, sh1 = prep_conv_params(params["w1"], params["g1"], params["b1"],
                               params["m1"], params["v1"], K1p)
    patches1 = jnp.pad(patches1, ((0, 0), (0, K1p - K1))).astype(jnp.bfloat16)
    y1 = conv_relu(patches1, w1, sh1)                                # (N*4*L2, C1) bf16
    L2 = oh2 * ow2
    y1 = y1.reshape(N, 4, L2, C1)                                    # metadata-only reshape

    # --- stage 2: fused conv3x3/s2 + folded BN + ReLU + global-avg-pool ------
    w2, sh2 = prep_conv_taps(params["w2"], params["g2"], params["b2"],
                             params["m2"], params["v2"])
    idx = jnp.arange(L2, dtype=jnp.int32)
    m_r = (idx >= ow2).astype(jnp.float32)          # row-shifted taps: zero where r == 0
    m_c = ((idx % ow2) != 0).astype(jnp.float32)    # col-shifted taps: zero where c == 0
    masks = jnp.stack([m_r, m_c], axis=0).reshape(2, L2, 1)
    feat = conv3x3s2_relu_gap(y1, w2, sh2, masks, ow2=ow2)           # (N, 1, C2) f32
    return feat.reshape(N, C2)


# ---------------------------------------------------------------------------
# Pure-JAX reference for verification (f32 throughout)
# ---------------------------------------------------------------------------
def reference_forward(params, x_nchw):
    def conv(x, w):
        return jax.lax.conv_general_dilated(
            x, w, window_strides=(2, 2), padding=((1, 1), (1, 1)),
            dimension_numbers=("NCHW", "OIHW", "NCHW"))

    def bn(x, g, b, m, v, eps=1e-5):
        g, b, m, v = (t.reshape(1, -1, 1, 1) for t in (g, b, m, v))
        return g * (x - m) / jnp.sqrt(v + eps) + b

    y = jax.nn.relu(bn(conv(x_nchw, params["w1"]),
                       params["g1"], params["b1"], params["m1"], params["v1"]))
    y = jax.nn.relu(bn(conv(y, params["w2"]),
                       params["g2"], params["b2"], params["m2"], params["v2"]))
    return jnp.mean(y, axis=(2, 3))


if __name__ == "__main__":
    key = jax.random.PRNGKey(0)
    pkey, xkey = jax.random.split(key)
    params = init_params(pkey, cin=3, c1=32, c2=64, k=3)

    # small input consistent with an image encoder: (batch=2, channels=3, 16x16)
    x = jax.random.normal(xkey, (2, 3, 16, 16), jnp.float32)

    out = jax.block_until_ready(image_encoder_forward(params, x))
    ref = reference_forward(params, x)

    assert out.shape == (2, 64), out.shape
    # bf16 matmul operands (f32 accumulate) vs f32 reference -> relaxed tolerance.
    max_err = float(jnp.max(jnp.abs(out - ref)))
    assert jnp.allclose(out, ref, atol=2e-2, rtol=2e-2), f"mismatch vs reference: {max_err}"

    print("KERNEL_OK")
</pallas_src>

<mosaic_0001>
module attributes {stable_mosaic.version = 11 : i64} {
  func.func @_conv_mm_shift_relu_kernel(%arg0: i32, %arg1: memref<64x32xbf16, #tpu.memory_space<vmem>>, %arg2: memref<32x32xbf16, #tpu.memory_space<vmem>>, %arg3: memref<1x32xf32, #tpu.memory_space<vmem>>, %arg4: memref<64x32xbf16, #tpu.memory_space<vmem>>) attributes {dimension_semantics = [#tpu.dimension_semantics<parallel>], iteration_bounds = array<i64: 2>, scalar_prefetch = 0 : i64, scratch_operands = 0 : i64, tpu.core_type = #tpu.core_type<tc>, window_params = [{transform_indices = @transform_0, window_bounds = array<i64: 64, 32>}, {pipeline_mode = #tpu.pipeline_mode<synchronous>, transform_indices = @transform_1, window_bounds = array<i64: 32, 32>}, {pipeline_mode = #tpu.pipeline_mode<synchronous>, transform_indices = @transform_2, window_bounds = array<i64: 1, 32>}, {transform_indices = @transform_3, window_bounds = array<i64: 64, 32>}]} {
    %c0 = arith.constant 0 : index
    %c0_0 = arith.constant 0 : index
    %0 = vector.load %arg1[%c0, %c0_0] : memref<64x32xbf16, #tpu.memory_space<vmem>>, vector<64x32xbf16>
    %c0_1 = arith.constant 0 : index
    %c0_2 = arith.constant 0 : index
    %1 = vector.load %arg2[%c0_1, %c0_2] : memref<32x32xbf16, #tpu.memory_space<vmem>>, vector<32x32xbf16>
    %cst = arith.constant dense<0.000000e+00> : vector<64x32xf32>
    %2 = tpu.matmul %0, %1, %cst {dimension_numbers = #tpu.dot_dimension_numbers<[1], [0], [0], [1], [0, 0, 1, 1], [], []>} : vector<64x32xbf16>, vector<32x32xbf16>, vector<64x32xf32> -> vector<64x32xf32>
    %c0_3 = arith.constant 0 : index
    %c0_4 = arith.constant 0 : index
    %3 = vector.load %arg3[%c0_3, %c0_4] : memref<1x32xf32, #tpu.memory_space<vmem>>, vector<1x32xf32>
    %4 = vector.broadcast %3 : vector<1x32xf32> to vector<64x32xf32>
    %5 = arith.addf %2, %4 : vector<64x32xf32>
    %cst_5 = arith.constant 0.000000e+00 : f32
    %6 = vector.broadcast %cst_5 : f32 to vector<64x32xf32>
    %7 = arith.maximumf %5, %6 : vector<64x32xf32>
    %8 = arith.truncf %7 : vector<64x32xf32> to vector<64x32xbf16>
    %c0_6 = arith.constant 0 : index
    %c0_7 = arith.constant 0 : index
    %9 = vector.load %arg4[%c0_6, %c0_7] : memref<64x32xbf16, #tpu.memory_space<vmem>>, vector<64x32xbf16>
    tpu.vector_store %arg4[%c0_6, %c0_7], %8 {strides = array<i32>} : memref<64x32xbf16, #tpu.memory_space<vmem>>, vector<64x32xbf16>,
    return
  }
  func.func @transform_0(%arg0: i32) -> (i32, i32) {
    %c0_i32 = arith.constant 0 : i32
    %c0_i32_0 = arith.constant 0 : i32
    return %arg0, %c0_i32 : i32, i32
  }
  func.func @transform_1(%arg0: i32) -> (i32, i32) {
    %c0_i32 = arith.constant 0 : i32
    %c0_i32_0 = arith.constant 0 : i32
    %c0_i32_1 = arith.constant 0 : i32
    return %c0_i32, %c0_i32_0 : i32, i32
  }
  func.func @transform_2(%arg0: i32) -> (i32, i32) {
    %c0_i32 = arith.constant 0 : i32
    %c0_i32_0 = arith.constant 0 : i32
    %c0_i32_1 = arith.constant 0 : i32
    return %c0_i32, %c0_i32_0 : i32, i32
  }
  func.func @transform_3(%arg0: i32) -> (i32, i32) {
    %c0_i32 = arith.constant 0 : i32
    %c0_i32_0 = arith.constant 0 : i32
    return %arg0, %c0_i32 : i32, i32
  }
}

</mosaic_0001>

<llo_original>
// kernel: tpu_custom_call.1
$region0: #{tpu_custom_call.1}
  #allocation0 [shape = 'u32[]', space=smem, size = 0x4, offset = 0x4, fixed_abs, tag = 'smem constant byte address 0x4 - core index']
  #allocation1 [shape = 'u32[144,128]{1,0:T(1,128)}', space=vmem, size = 0x12000, scoped, tag = 'internal scratch']
  %s0 = inlined_call_operand.vmem [shape: bf16[128,32], index: 0, kind: input, shape index: {}]
  %s1 = inlined_call_operand.vmem [shape: bf16[32,32], index: 1, kind: input, shape index: {}]
  %s2 = inlined_call_operand.vmem [shape: f32[1,32], index: 2, kind: input, shape index: {}]
  %s3 = inlined_call_operand.vmem [shape: bf16[128,32], index: 3, kind: output, shape index: {}]
  %s4 = sld [smem:[#allocation0]]
  $region45: #{tpu_custom_call.1} parent=0
    _
  %s6 = ssub.s32 1, %s4
  %s7 = scalar_select 0, %s6, %s4
  loop: start=0, step=1, limit=4
  $region2: #{tpu_custom_call.1} parent=0 // loop_pre_header
    _
  $region3: #{tpu_custom_call.1} parent=0 // loop_header
    %s9 = sphi 0, %s13
    %p10 = scmp.ge.s32.totalorder %s9, 4
    %s19 = sphi 0, %s21
    %s22 = sphi 0, %s19
    %s23 = sphi 0, %s22
    %s39 = sphi 0, %s23
    %s43 = sphi 0, %s43
    %s45 = sphi 0, %s43
    %s46 = sphi 0, %s45
    %s60 = sphi 0, %s46
    %s64 = sphi 0, %s64
    %s66 = sphi 0, %s64
    %s67 = sphi 0, %s66
    %s81 = sphi 0, %s67
    %s87 = sphi 0, %s89
    %s90 = sphi 0, %s87
    %s91 = sphi 0, %s90
    %s107 = sphi 0, %s91
  $region4: #{tpu_custom_call.1} parent=0 // loop_header_branch
    %12 = sbr.rel (%p10) target = $region8
  $region5: #{tpu_custom_call.1} parent=0 // loop_body
    %s14 = ssub.s32 %s9, 1
    %s15 = ssub.s32 %s9, 2
    %s16 = sadd.s32 %s9, 1
    %s17 = ssub.s32 %s9, %s16
    %p18 = scmp.eq.s32.totalorder %s17, 0
    %s20 = sadd.s32 %s19, 1
    %s21 = scalar_select %p18, %s19, %s20
    %p24 = pneg %p18
    %p25 = scmp.eq.s32.totalorder %s9, 1
    %p26 = por %p24, %p25
    %p27 = scmp.ne.s32.totalorder %s19, %s22
    %p28 = scmp.eq.s32.totalorder %s9, 0
    %p29 = por %p27, %p28
    %p30 = scmp.ne.s32.totalorder %s19, %s22
    %p31 = scmp.eq.s32.totalorder %s14, 1
    %p32 = por %p30, %p31
    %p33 = scmp.ne.s32.totalorder %s22, %s23
    %p34 = scmp.eq.s32.totalorder %s14, 0
    %p35 = por %p33, %p34
    %p36 = scmp.ne.s32.totalorder %s22, %s23
    %p37 = scmp.eq.s32.totalorder %s15, 1
    %p38 = por %p36, %p37
    %p40 = scmp.ne.s32.totalorder %s23, %s39
    %p41 = scmp.eq.s32.totalorder %s15, 0
    %p42 = por %p40, %p41
    %s44 = sadd.s32 %s43, 1
    %p47 = scmp.eq.s32.totalorder %s9, 1
    %p48 = scmp.ne.s32.totalorder %s43, %s45
    %p49 = scmp.eq.s32.totalorder %s9, 0
    %p50 = por %p48, %p49
    %p51 = scmp.ne.s32.totalorder %s43, %s45
    %p52 = scmp.eq.s32.totalorder %s14, 1
    %p53 = por %p51, %p52
    %p54 = scmp.ne.s32.totalorder %s45, %s46
    %p55 = scmp.eq.s32.totalorder %s14, 0
    %p56 = por %p54, %p55
    %p57 = scmp.ne.s32.totalorder %s45, %s46
    %p58 = scmp.eq.s32.totalorder %s15, 1
    %p59 = por %p57, %p58
    %p61 = scmp.ne.s32.totalorder %s46, %s60
    %p62 = scmp.eq.s32.totalorder %s15, 0
    %p63 = por %p61, %p62
    %s65 = sadd.s32 %s64, 1
    %p68 = scmp.eq.s32.totalorder %s9, 1
    %p69 = scmp.ne.s32.totalorder %s64, %s66
    %p70 = scmp.eq.s32.totalorder %s9, 0
    %p71 = por %p69, %p70
    %p72 = scmp.ne.s32.totalorder %s64, %s66
    %p73 = scmp.eq.s32.totalorder %s14, 1
    %p74 = por %p72, %p73
    %p75 = scmp.ne.s32.totalorder %s66, %s67
    %p76 = scmp.eq.s32.totalorder %s14, 0
    %p77 = por %p75, %p76
    %p78 = scmp.ne.s32.totalorder %s66, %s67
    %p79 = scmp.eq.s32.totalorder %s15, 1
    %p80 = por %p78, %p79
    %p82 = scmp.ne.s32.totalorder %s67, %s81
    %p83 = scmp.eq.s32.totalorder %s15, 0
    %p84 = por %p82, %p83
    %s85 = ssub.s32 %s9, %s16
    %p86 = scmp.eq.s32.totalorder %s85, 0
    %s88 = sadd.s32 %s87, 1
    %s89 = scalar_select %p86, %s87, %s88
    %p92 = pneg %p86
    %p93 = scmp.eq.s32.totalorder %s9, 1
    %p94 = por %p92, %p93
    %p95 = scmp.ne.s32.totalorder %s87, %s90
    %p96 = scmp.eq.s32.totalorder %s9, 0
    %p97 = por %p95, %p96
    %p98 = scmp.ne.s32.totalorder %s87, %s90
    %p99 = scmp.eq.s32.totalorder %s14, 1
    %p100 = por %p98, %p99
    %p101 = scmp.ne.s32.totalorder %s90, %s91
    %p102 = scmp.eq.s32.totalorder %s14, 0
    %p103 = por %p101, %p102
    %p104 = scmp.ne.s32.totalorder %s90, %s91
    %p105 = scmp.eq.s32.totalorder %s15, 1
    %p106 = por %p104, %p105
    %p108 = scmp.ne.s32.totalorder %s91, %s107
    %p109 = scmp.eq.s32.totalorder %s15, 0
    %p110 = por %p108, %p109
    %p111 = scmp.le.s32.totalorder 1, %s9
    %p112 = scmp.lt.s32.totalorder %s9, 3
    %p113 = pnand %p111, %p112
    %p114 = pneg %p113
    // Predicated region
    $region9: #{tpu_custom_call.1} parent=5 // pred_check
      _
    $region10: #{tpu_custom_call.1} parent=5 // pred_check_branch
      %116 = sbr.rel (%p113) target = $region12
    $region11: #{tpu_custom_call.1} parent=5 // pred_region
      %s117 = ssub.s32 %s9, 1
      // Predicated region
      $region13: #{tpu_custom_call.1} parent=11 // pred_check
        %p118 = pneg %p56
      $region14: #{tpu_custom_call.1} parent=11 // pred_check_branch
        %120 = sbr.rel (%p118) target = $region16
      $region15: #{tpu_custom_call.1} parent=11 // pred_region
        _
      $region16: #{tpu_custom_call.1} parent=11 // pred_fallthru
        _
      // Predicated region
      $region17: #{tpu_custom_call.1} parent=11 // pred_check
        %p121 = pneg %p77
      $region18: #{tpu_custom_call.1} parent=11 // pred_check_branch
        %123 = sbr.rel (%p121) target = $region20
      $region19: #{tpu_custom_call.1} parent=11 // pred_region
        _
      $region20: #{tpu_custom_call.1} parent=11 // pred_fallthru
        _
    $region12: #{tpu_custom_call.1} parent=5 // pred_fallthru
      _
    %p124 = scmp.lt.s32.totalorder %s9, 2
    // Predicated region
    $region21: #{tpu_custom_call.1} parent=5 // pred_check
      %p125 = pneg %p124
    $region22: #{tpu_custom_call.1} parent=5 // pred_check_branch
      %127 = sbr.rel (%p125) target = $region24
    $region23: #{tpu_custom_call.1} parent=5 // pred_region
      // Predicated region
      $region25: #{tpu_custom_call.1} parent=23 // pred_check
        %p128 = pneg %p29
      $region26: #{tpu_custom_call.1} parent=23 // pred_check_branch
        %130 = sbr.rel (%p128) target = $region28
      $region27: #{tpu_custom_call.1} parent=23 // pred_region
        %s131 = smul.u32 8, %s9
        %p132 = scmp.lt.s32.totalorder %s131, 15
        %s133 = scalar_select %p132, %s131, 15
        %s134 = smul.addr %s133, 4
        %s135 = scalar_lea.vmem %s0, %s134
        %s136 = smul.u32 8, %s9
      $region28: #{tpu_custom_call.1} parent=23 // pred_fallthru
        _
    $region24: #{tpu_custom_call.1} parent=5 // pred_fallthru
      _
    %p137 = scmp.le.s32.totalorder 1, %s9
    %p138 = scmp.lt.s32.totalorder %s9, 3
    %p139 = pnand %p137, %p138
    %p140 = pneg %p139
    // Predicated region
    $region29: #{tpu_custom_call.1} parent=5 // pred_check
      _
    $region30: #{tpu_custom_call.1} parent=5 // pred_check_branch
      %142 = sbr.rel (%p139) target = $region32
    $region31: #{tpu_custom_call.1} parent=5 // pred_region
      %s143 = ssub.s32 %s9, 1
      %s144 = smul.u32 8, %s14
      %p145 = scmp.lt.s32.totalorder %s144, 15
      %s146 = scalar_select %p145, %s144, 15
      %s147 = smul.addr %s146, 4
      %s148 = scalar_lea.vmem %s0, %s147
      %p149 = pneg %p35
      %p150 = pneg %p32
      %p151 = pneg %p56
      %p152 = pneg %p53
      %p153 = pneg %p77
      %p154 = pneg %p74
      %p155 = pneg %p103
      %p156 = pneg %p100
      %s157 = smul.u32 8, %s14
      %p158 = scmp.lt.s32.totalorder %s157, 15
      %s159 = scalar_select %p158, %s157, 15
      %s160 = smul.addr %s159, 4
      %s161 = scalar_lea.vmem %s3, %s160
      %s162 = smul.u32 8, %s14
      %p163 = scmp.lt.s32.totalorder %s162, 15
      %s164 = scalar_select %p163, %s162, 15
      %s165 = smul.addr %s164, 4
      %s166 = scalar_lea.vmem %s0, %s165
      %s167 = smul.u32 8, %s14
      %s168 = smul.u32 8, %s14
      %p169 = scmp.lt.s32.totalorder %s168, 15
      %s170 = scalar_select %p169, %s168, 15
      %s171 = smul.addr %s170, 4
      %s172 = scalar_lea.vmem %s3, %s171
      %s173 = smul.u32 8, %s14
      %v175 = vld [vmem:[%s166] sm:$0xf]
      %v176 = vld [vmem:[%s166 + $0x4] sm:$0xf]
      %v177 = vld [vmem:[%s166 + $0x8] sm:$0xf]
      %v178 = vld [vmem:[%s166 + $0xc] sm:$0xf]
      %v179 = vld [vmem:[%s166 + $0x10] sm:$0xf]
      %v180 = vld [vmem:[%s166 + $0x14] sm:$0xf]
      %v181 = vld [vmem:[%s166 + $0x18] sm:$0xf]
      %v182 = vld [vmem:[%s166 + $0x1c] sm:$0xf]
      %v183 = vld [vmem:[%s1] sm:$0xf]
      %v184 = vld [vmem:[%s1 + $0x4] sm:$0xf]
      %v185 = vld [vmem:[%s1 + $0x8] sm:$0xf]
      %v186 = vld [vmem:[%s1 + $0xc] sm:$0xf]
      %v187 = vld [vmem:[%s2] sm:$0x1]
      %v189 = vlaneseq
      %v190 = vshrl.u32 %v189, 7
      %v191 = vsub.s32 0, %v190
      %v192 = vrot.slane %v187, %v191
      %v202 = vunpack.c.l.b16 %v175
      %v203 = vunpack.c.l.b16 %v176
      %v204 = vunpack.c.l.b16 %v177
      %v205 = vunpack.c.l.b16 %v178
      %v206 = vunpack.c.l.b16 %v179
      %v207 = vunpack.c.l.b16 %v180
      %v208 = vunpack.c.l.b16 %v181
      %v209 = vunpack.c.l.b16 %v182
      %v210 = vpack.c.b16 %v203, %v202
      %v211 = vpack.c.b16 %v205, %v204
      %v212 = vpack.c.b16 %v207, %v206
      %v213 = vpack.c.b16 %v209, %v208
      %v218 = vunpack.c.l.b16 %v183
      %v219 = vunpack.c.l.b16 %v184
      %v220 = vunpack.c.l.b16 %v185
      %v221 = vunpack.c.l.b16 %v186
      %v222 = vpack.c.b16 %v219, %v218
      %v223 = vpack.c.b16 %v221, %v220
      %vm226 = vcmask 261120
      %v228 = vsel %vm226, %v210, 0
      %v231 = vsel %vm226, %v211, 0
      %v234 = vsel %vm226, %v212, 0
      %v237 = vsel %vm226, %v213, 0
      %239 = vmatprep.subr.bf16.mxu0 0
      %240 = vmatpush1.bf16.msra.mxu0 %v222
      %241 = vmatprep.subr.bf16.mxu0 0
      %242 = vmatpush1.bf16.msra.mxu0 %v223
      %243 = vmatprep.subr.bf16.mxu0 0
      %244 = vmatpush1.bf16.msra.mxu0 0
      %245 = vmatprep.subr.bf16.mxu0 0
      %246 = vmatpush1.bf16.msra.mxu0 0
      %247 = vmatprep.subr.bf16.mxu0 0
      %248 = vmatpush1.bf16.msra.mxu0 0
      %249 = vmatprep.subr.bf16.mxu0 0
      %250 = vmatpush1.bf16.msra.mxu0 0
      %251 = vmatprep.subr.bf16.mxu0 0
      %252 = vmatpush1.bf16.msra.mxu0 0
      %253 = vmatprep.subr.bf16.mxu0 0
      %254 = vmatpush1.bf16.msra.mxu0 0
      %255 = vmatprep.subr.bf16.mxu0 0
      %256 = vmatpush1.bf16.msra.mxu0 0
      %257 = vmatprep.subr.bf16.mxu0 0
      %258 = vmatpush1.bf16.msra.mxu0 0
      %259 = vmatprep.subr.bf16.mxu0 0
      %260 = vmatpush1.bf16.msra.mxu0 0
      %261 = vmatprep.subr.bf16.mxu0 0
      %262 = vmatpush1.bf16.msra.mxu0 0
      %263 = vmatprep.subr.bf16.mxu0 0
      %264 = vmatpush1.bf16.msra.mxu0 0
      %265 = vmatprep.subr.bf16.mxu0 0
      %266 = vmatpush1.bf16.msra.mxu0 0
      %267 = vmatprep.subr.bf16.mxu0 0
      %268 = vmatpush1.bf16.msra.mxu0 0
      %269 = vmatprep.subr.bf16.mxu0 0
      %270 = vmatpush1.bf16.msra.mxu0 0
      %271 = vmatprep.mubr.bf16.mxu0 0
      %272 = vmatmul.mubr.bf16.gmra.mrb[0].mxu0 %v228
      %v273 = vpop.f32.mrb[0].mxu0
      %v274 = vadd.f32 %v192, %v273
      %v275 = vpop.f32.mrb[0].mxu0
      %v276 = vpop.f32.mrb[0].mxu0
      %v277 = vadd.f32 %v192, %v276
      %v278 = vpop.f32.mrb[0].mxu0
      %279 = vmatprep.mubr.bf16.mxu0 0
      %280 = vmatmul.mubr.bf16.gmra.mrb[0].mxu0 %v231
      %v281 = vpop.f32.mrb[0].mxu0
      %v282 = vadd.f32 %v192, %v281
      %v283 = vpop.f32.mrb[0].mxu0
      %v284 = vpop.f32.mrb[0].mxu0
      %v285 = vadd.f32 %v192, %v284
      %v286 = vpop.f32.mrb[0].mxu0
      %287 = vmatprep.mubr.bf16.mxu0 0
      %288 = vmatmul.mubr.bf16.gmra.mrb[0].mxu0 %v234
      %v289 = vpop.f32.mrb[0].mxu0
      %v290 = vadd.f32 %v192, %v289
      %v291 = vpop.f32.mrb[0].mxu0
      %v292 = vpop.f32.mrb[0].mxu0
      %v293 = vadd.f32 %v192, %v292
      %v294 = vpop.f32.mrb[0].mxu0
      %295 = vmatprep.mubr.bf16.mxu0 0
      %296 = vmatmul.mubr.bf16.gmra.mrb[0].mxu0 %v237
      %v297 = vpop.f32.mrb[0].mxu0
      %v298 = vadd.f32 %v192, %v297
      %v299 = vpop.f32.mrb[0].mxu0
      %v300 = vpop.f32.mrb[0].mxu0
      %v301 = vadd.f32 %v192, %v300
      %v302 = vpop.f32.mrb[0].mxu0
      %303 = vdwg.mxu0
      %v304 = vmax.f32 %v274, 0.0
      %v305 = vmax.f32 %v277, 0.0
      %v306 = vmax.f32 %v282, 0.0
      %v307 = vmax.f32 %v285, 0.0
      %v308 = vmax.f32 %v290, 0.0
      %v309 = vmax.f32 %v293, 0.0
      %v310 = vmax.f32 %v298, 0.0
      %v311 = vmax.f32 %v301, 0.0
      %v312 = vpack.c.bf16 %v305, %v304
      %v313 = vpack.c.bf16 %v307, %v306
      %v314 = vpack.c.bf16 %v309, %v308
      %v315 = vpack.c.bf16 %v311, %v310
      %v320 = vunpack.c.l.b16 %v312
      %v321 = vunpack.c.h.b16 %v312
      %v322 = vunpack.c.l.b16 %v313
      %v323 = vunpack.c.h.b16 %v313
      %v324 = vunpack.c.l.b16 %v314
      %v325 = vunpack.c.h.b16 %v314
      %v326 = vunpack.c.l.b16 %v315
      %v327 = vunpack.c.h.b16 %v315
      %v328 = vpack.c.b16 %v320, %v320
      %v329 = vpack.c.b16 %v321, %v321
      %v330 = vpack.c.b16 %v322, %v322
      %v331 = vpack.c.b16 %v323, %v323
      %v332 = vpack.c.b16 %v324, %v324
      %v333 = vpack.c.b16 %v325, %v325
      %v334 = vpack.c.b16 %v326, %v326
      %v335 = vpack.c.b16 %v327, %v327
      %vm344 = vcmask 257024
      %345 = vst.msk [vmem:[%s172] sm:$0xf] %vm344, %v328
      %346 = vst.msk [vmem:[%s172 + $0x4] sm:$0xf] %vm344, %v329
      %347 = vst.msk [vmem:[%s172 + $0x8] sm:$0xf] %vm344, %v330
      %348 = vst.msk [vmem:[%s172 + $0xc] sm:$0xf] %vm344, %v331
      %349 = vst.msk [vmem:[%s172 + $0x10] sm:$0xf] %vm344, %v332
      %350 = vst.msk [vmem:[%s172 + $0x14] sm:$0xf] %vm344, %v333
      %351 = vst.msk [vmem:[%s172 + $0x18] sm:$0xf] %vm344, %v334
      %352 = vst.msk [vmem:[%s172 + $0x1c] sm:$0xf] %vm344, %v335
      %s353 = smul.u32 8, %s14
      %p354 = scmp.lt.s32.totalorder %s353, 15
      %s355 = scalar_select %p354, %s353, 15
      %s356 = smul.addr %s355, 4
      %s357 = scalar_lea.vmem %s3, %s356
      // Predicated region
      $region33: #{tpu_custom_call.1} parent=31 // pred_check
        %p358 = pneg %p100
      $region34: #{tpu_custom_call.1} parent=31 // pred_check_branch
        %360 = sbr.rel (%p358) target = $region36
      $region35: #{tpu_custom_call.1} parent=31 // pred_region
        %s361 = smul.u32 8, %s14
      $region36: #{tpu_custom_call.1} parent=31 // pred_fallthru
        _
    $region32: #{tpu_custom_call.1} parent=5 // pred_fallthru
      _
    %p362 = scmp.le.s32.totalorder 2, %s9
    // Predicated region
    $region37: #{tpu_custom_call.1} parent=5 // pred_check
      %p363 = pneg %p362
    $region38: #{tpu_custom_call.1} parent=5 // pred_check_branch
      %365 = sbr.rel (%p363) target = $region40
    $region39: #{tpu_custom_call.1} parent=5 // pred_region
      %s366 = ssub.s32 %s9, 2
      // Predicated region
      $region41: #{tpu_custom_call.1} parent=39 // pred_check
        %p367 = pneg %p106
      $region42: #{tpu_custom_call.1} parent=39 // pred_check_branch
        %369 = sbr.rel (%p367) target = $region44
      $region43: #{tpu_custom_call.1} parent=39 // pred_region
        %s370 = smul.u32 8, %s15
        %p371 = scmp.lt.s32.totalorder %s370, 15
        %s372 = scalar_select %p371, %s370, 15
        %s373 = smul.addr %s372, 4
        %s374 = scalar_lea.vmem %s3, %s373
      $region44: #{tpu_custom_call.1} parent=39 // pred_fallthru
        _
    $region40: #{tpu_custom_call.1} parent=5 // pred_fallthru
      _
  $region6: #{tpu_custom_call.1} parent=0 // loop_footer
    %s13 = sadd.s32 1, %s9
  $region7: #{tpu_custom_call.1} parent=0 // loop_footer_branch
    %8 = sbr.rel target = $region3
  $region8: #{tpu_custom_call.1} parent=0 // loop_exit
    _

</llo_original>
